<compile_context>
chip_gen: v7x
topology: tpu7x:2x2x1
jax: 0.10.0
libtpu: 0.0.40
codegen_flags: <defaults>
</compile_context>

<pallas_src>
import functools

import jax
import jax.numpy as jnp
from jax.experimental import pallas as pl
from jax.experimental.pallas import tpu as pltpu


def _round_up(n, m):
    return (n + m - 1) // m * m


def _vmem_capacity_bytes():
    """Best-effort physical VMEM capacity; falls back to v7x's 64 MiB/TC."""
    try:
        info = pltpu.get_tpu_info()
        cap = getattr(info, "vmem_capacity_bytes", None)
        if cap:
            return int(cap)
    except Exception:
        pass
    return 64 << 20


def gated_cross_kernel(x_ref, wcg_ref, bcg_ref, o_ref, *, num_layers, dp):
    """One batch tile, all layers unrolled in-kernel.

    x_ref:   (TB, Dp)        bf16 batch tile (padded lanes/rows are zero)
    wcg_ref: (L, Dp, 2*Dp)   bf16 fused [Wc | Wg], pre-transposed for x @ W
    bcg_ref: (L, 1, 2*Dp)    f32 fused [bc + bias | bg]
    o_ref:   (TB, Dp)        bf16 output tile
    """
    x0 = x_ref[...].astype(jnp.float32)       # upcast once; chain stays f32
    x = x0
    for i in range(num_layers):               # static unroll: L small & static
        # Single fused MXU matmul for cross + gate branches; f32 accumulation.
        z = jnp.dot(x.astype(jnp.bfloat16), wcg_ref[i],
                    preferred_element_type=jnp.float32) + bcg_ref[i]
        xc = z[:, :dp]                         # cross branch (bias pre-folded)
        xg = jax.nn.sigmoid(z[:, dp:])         # gate branch (EUP)
        x = x0 * xc * xg + x
    o_ref[...] = x.astype(o_ref.dtype)         # f32 -> bf16 store


def prepare_params(wc, bc, wg, bg, bias):
    """ONE-TIME parameter prep (call at init, not per forward):
    transpose PyTorch Linear weights to x@W layout, fold the extra per-layer
    bias into the cross bias, zero-pad the feature dim to a multiple of 128,
    fuse cross/gate along the output dim, and cast weights to bf16."""
    L, D, _ = wc.shape
    Dp = _round_up(max(D, 128), 128)
    pad = Dp - D

    def pad_w(w):  # (L, D_out, D_in) -> transposed + padded (L, Dp, Dp)
        wt = jnp.transpose(w, (0, 2, 1))
        return jnp.pad(wt, ((0, 0), (0, pad), (0, pad)))

    def pad_b(b):  # (L, D) -> (L, 1, Dp)
        return jnp.pad(b, ((0, 0), (0, pad))).reshape(L, 1, Dp)

    wcg = jnp.concatenate([pad_w(wc), pad_w(wg)], axis=-1).astype(jnp.bfloat16)
    bcg = jnp.concatenate([pad_b(bc + bias), pad_b(bg)], axis=-1).astype(jnp.float32)
    return wcg, bcg, D


def gated_cross_forward(x, wcg, bcg, d_orig, *, tb=512):
    """Forward pass. x: [B, D]; wcg/bcg from prepare_params.

    Returns a bf16 [B, D] array (bf16 activation I/O; compute is f32 inside)."""
    B, D = x.shape
    assert D == d_orig
    L, Dp, Dp2 = wcg.shape
    assert Dp2 == 2 * Dp

    # Batch tile: as large as reasonable (amortizes per-step pipeline
    # overhead), but split so the "parallel" axis has >= 2 grid steps whenever
    # the batch allows it (v7x has 2 TensorCores; a 1-step grid idles one).
    TB = min(_round_up(B, 8), tb)
    if _round_up(B, TB) // TB < 2 and TB > 8:
        TB = _round_up((TB + 1) // 2, 8)
    Bp = _round_up(B, TB)

    # bf16 activation I/O; this pad+cast is allowed to fuse into the
    # pallas_call (allow_input_fusion) so it is not an extra HBM round trip.
    xp = jnp.pad(x.astype(jnp.bfloat16), ((0, Bp - B), (0, Dp - D)))

    kernel = functools.partial(gated_cross_kernel, num_layers=L, dp=Dp)

    # Generation-aware VMEM budget: single-buffered resident weights,
    # double-buffered bf16 x/o tiles, f32 scratch (x0, x and the (TB,2Dp) z),
    # plus slack; capped at ~3/4 of physical VMEM (48 MiB v7x, 96 MiB v5e/v6e).
    weight_bytes = (wcg.size * wcg.dtype.itemsize
                    + bcg.size * bcg.dtype.itemsize)
    act_bytes = 2 * 2 * TB * Dp * 2                      # 2 tiles x 2 bufs, bf16
    scratch_bytes = 2 * TB * Dp * 4 + TB * 2 * Dp * 4    # x0/x + z, f32
    vmem_bytes = weight_bytes + act_bytes + scratch_bytes + (4 << 20)
    vmem_limit = int(min(max(vmem_bytes, 16 << 20),
                         _vmem_capacity_bytes() * 3 // 4))

    out = pl.pallas_call(
        kernel,
        out_shape=jax.ShapeDtypeStruct((Bp, Dp), jnp.bfloat16),
        grid=(Bp // TB,),
        in_specs=[
            pl.BlockSpec((TB, Dp), lambda i: (i, 0)),            # batch-tiled x
            pl.BlockSpec((L, Dp, 2 * Dp), lambda i: (0, 0, 0),   # resident W
                         pipeline_mode=pl.Buffered(1)),
            pl.BlockSpec((L, 1, 2 * Dp), lambda i: (0, 0, 0),    # resident b
                         pipeline_mode=pl.Buffered(1)),
        ],
        out_specs=pl.BlockSpec((TB, Dp), lambda i: (i, 0)),
        compiler_params=pltpu.CompilerParams(
            dimension_semantics=("parallel",),        # megacore sharding
            allow_input_fusion=[True, False, False],  # fuse the x pad/cast in
            vmem_limit_bytes=vmem_limit),
    )(xp, wcg, bcg)

    return out[:B, :D]


def reference_forward(x, wc, bc, wg, bg, bias):
    """Pure-JAX f32 reference mirroring the PyTorch module."""
    x0 = x
    L = wc.shape[0]
    for i in range(L):
        xc = x @ wc[i].T + bc[i]
        xg = jax.nn.sigmoid(x @ wg[i].T + bg[i])
        x = x0 * (xc + bias[i]) * xg + x
    return x


if __name__ == "__main__":
    # NOTE: demo shapes (B=8, D=32) only exercise correctness; they measure
    # fixed per-call overhead, not kernel throughput.  Tune at production
    # sizes (D >= 128, large B) where the tiling choices above matter.
    B = 8    # batch
    D = 32   # input_dim
    L = 3    # num_layers

    key = jax.random.PRNGKey(0)
    k_x, k_wc, k_bc, k_wg, k_bg = jax.random.split(key, 5)

    x = jax.random.normal(k_x, (B, D), dtype=jnp.float32)

    scale = 1.0 / jnp.sqrt(D)
    wc = jax.random.uniform(k_wc, (L, D, D), jnp.float32, -scale, scale)
    bc = jax.random.uniform(k_bc, (L, D), jnp.float32, -scale, scale)
    wg = jax.random.uniform(k_wg, (L, D, D), jnp.float32, -scale, scale)
    bg = jax.random.uniform(k_bg, (L, D), jnp.float32, -scale, scale)
    bias = jnp.zeros((L, D), jnp.float32)  # torch.zeros((input_dim,)) per layer

    # One-time parameter preparation (hoisted out of the forward path).
    wcg, bcg, d_orig = prepare_params(wc, bc, wg, bg, bias)

    out = jax.block_until_ready(gated_cross_forward(x, wcg, bcg, d_orig))
    ref = reference_forward(x, wc, bc, wg, bg, bias)

    assert out.shape == (B, D)
    assert out.dtype == jnp.bfloat16
    # bf16 weights + bf16 activation I/O -> looser tolerance than the f32 ref.
    assert jnp.allclose(out.astype(jnp.float32), ref, atol=1e-1, rtol=5e-2), \
        "mismatch vs reference"
    print("KERNEL_OK")
</pallas_src>

<mosaic_0001>
module attributes {stable_mosaic.version = 11 : i64} {
  func.func @gated_cross_kernel(%arg0: i32, %arg1: memref<8x128xbf16, #tpu.memory_space<vmem>>, %arg2: memref<3x128x256xbf16, #tpu.memory_space<vmem>>, %arg3: memref<3x1x256xf32, #tpu.memory_space<vmem>>, %arg4: memref<8x128xbf16, #tpu.memory_space<vmem>>) attributes {dimension_semantics = [#tpu.dimension_semantics<parallel>], iteration_bounds = array<i64: 1>, scalar_prefetch = 0 : i64, scratch_operands = 0 : i64, tpu.core_type = #tpu.core_type<tc>, window_params = [{transform_indices = @transform_0, window_bounds = array<i64: 8, 128>}, {pipeline_mode = #tpu.pipeline_mode<synchronous>, transform_indices = @transform_1, window_bounds = array<i64: 3, 128, 256>}, {pipeline_mode = #tpu.pipeline_mode<synchronous>, transform_indices = @transform_2, window_bounds = array<i64: 3, 1, 256>}, {transform_indices = @transform_3, window_bounds = array<i64: 8, 128>}]} {
    %c0 = arith.constant 0 : index
    %c0_0 = arith.constant 0 : index
    %0 = vector.load %arg1[%c0, %c0_0] : memref<8x128xbf16, #tpu.memory_space<vmem>>, vector<8x128xbf16>
    %1 = arith.extf %0 : vector<8x128xbf16> to vector<8x128xf32>
    %2 = arith.truncf %1 : vector<8x128xf32> to vector<8x128xbf16>
    %c0_1 = arith.constant 0 : index
    %c0_2 = arith.constant 0 : index
    %c0_3 = arith.constant 0 : index
    %3 = vector.load %arg2[%c0_1, %c0_2, %c0_3] : memref<3x128x256xbf16, #tpu.memory_space<vmem>>, vector<1x128x256xbf16>
    %4 = vector.shape_cast %3 : vector<1x128x256xbf16> to vector<128x256xbf16>
    %cst = arith.constant dense<0.000000e+00> : vector<8x256xf32>
    %5 = tpu.matmul %2, %4, %cst {dimension_numbers = #tpu.dot_dimension_numbers<[1], [0], [0], [1], [0, 0, 1, 1], [], []>} : vector<8x128xbf16>, vector<128x256xbf16>, vector<8x256xf32> -> vector<8x256xf32>
    %c0_4 = arith.constant 0 : index
    %c0_5 = arith.constant 0 : index
    %c0_6 = arith.constant 0 : index
    %6 = vector.load %arg3[%c0_4, %c0_5, %c0_6] : memref<3x1x256xf32, #tpu.memory_space<vmem>>, vector<1x1x256xf32>
    %7 = vector.shape_cast %6 : vector<1x1x256xf32> to vector<1x256xf32>
    %8 = vector.broadcast %7 : vector<1x256xf32> to vector<8x256xf32>
    %9 = arith.addf %5, %8 : vector<8x256xf32>
    %10 = vector.extract_strided_slice %9 {offsets = [0, 0], sizes = [8, 128], strides = [1, 1]} : vector<8x256xf32> to vector<8x128xf32>
    %11 = vector.extract_strided_slice %9 {offsets = [0, 128], sizes = [8, 128], strides = [1, 1]} : vector<8x256xf32> to vector<8x128xf32>
    %12 = arith.negf %11 : vector<8x128xf32>
    %13 = math.exp %12 : vector<8x128xf32>
    %cst_7 = arith.constant 1.000000e+00 : f32
    %14 = vector.broadcast %cst_7 : f32 to vector<8x128xf32>
    %15 = arith.addf %14, %13 : vector<8x128xf32>
    %16 = arith.divf %14, %15 : vector<8x128xf32>
    %17 = arith.mulf %1, %10 : vector<8x128xf32>
    %18 = arith.mulf %17, %16 : vector<8x128xf32>
    %19 = arith.addf %18, %1 : vector<8x128xf32>
    %20 = arith.truncf %19 : vector<8x128xf32> to vector<8x128xbf16>
    %c1 = arith.constant 1 : index
    %c0_8 = arith.constant 0 : index
    %c0_9 = arith.constant 0 : index
    %21 = vector.load %arg2[%c1, %c0_8, %c0_9] : memref<3x128x256xbf16, #tpu.memory_space<vmem>>, vector<1x128x256xbf16>
    %22 = vector.shape_cast %21 : vector<1x128x256xbf16> to vector<128x256xbf16>
    %cst_10 = arith.constant dense<0.000000e+00> : vector<8x256xf32>
    %23 = tpu.matmul %20, %22, %cst_10 {dimension_numbers = #tpu.dot_dimension_numbers<[1], [0], [0], [1], [0, 0, 1, 1], [], []>} : vector<8x128xbf16>, vector<128x256xbf16>, vector<8x256xf32> -> vector<8x256xf32>
    %c1_11 = arith.constant 1 : index
    %c0_12 = arith.constant 0 : index
    %c0_13 = arith.constant 0 : index
    %24 = vector.load %arg3[%c1_11, %c0_12, %c0_13] : memref<3x1x256xf32, #tpu.memory_space<vmem>>, vector<1x1x256xf32>
    %25 = vector.shape_cast %24 : vector<1x1x256xf32> to vector<1x256xf32>
    %26 = vector.broadcast %25 : vector<1x256xf32> to vector<8x256xf32>
    %27 = arith.addf %23, %26 : vector<8x256xf32>
    %28 = vector.extract_strided_slice %27 {offsets = [0, 0], sizes = [8, 128], strides = [1, 1]} : vector<8x256xf32> to vector<8x128xf32>
    %29 = vector.extract_strided_slice %27 {offsets = [0, 128], sizes = [8, 128], strides = [1, 1]} : vector<8x256xf32> to vector<8x128xf32>
    %30 = arith.negf %29 : vector<8x128xf32>
    %31 = math.exp %30 : vector<8x128xf32>
    %cst_14 = arith.constant 1.000000e+00 : f32
    %32 = vector.broadcast %cst_14 : f32 to vector<8x128xf32>
    %33 = arith.addf %32, %31 : vector<8x128xf32>
    %34 = arith.divf %32, %33 : vector<8x128xf32>
    %35 = arith.mulf %1, %28 : vector<8x128xf32>
    %36 = arith.mulf %35, %34 : vector<8x128xf32>
    %37 = arith.addf %36, %19 : vector<8x128xf32>
    %38 = arith.truncf %37 : vector<8x128xf32> to vector<8x128xbf16>
    %c2 = arith.constant 2 : index
    %c0_15 = arith.constant 0 : index
    %c0_16 = arith.constant 0 : index
    %39 = vector.load %arg2[%c2, %c0_15, %c0_16] : memref<3x128x256xbf16, #tpu.memory_space<vmem>>, vector<1x128x256xbf16>
    %40 = vector.shape_cast %39 : vector<1x128x256xbf16> to vector<128x256xbf16>
    %cst_17 = arith.constant dense<0.000000e+00> : vector<8x256xf32>
    %41 = tpu.matmul %38, %40, %cst_17 {dimension_numbers = #tpu.dot_dimension_numbers<[1], [0], [0], [1], [0, 0, 1, 1], [], []>} : vector<8x128xbf16>, vector<128x256xbf16>, vector<8x256xf32> -> vector<8x256xf32>
    %c2_18 = arith.constant 2 : index
    %c0_19 = arith.constant 0 : index
    %c0_20 = arith.constant 0 : index
    %42 = vector.load %arg3[%c2_18, %c0_19, %c0_20] : memref<3x1x256xf32, #tpu.memory_space<vmem>>, vector<1x1x256xf32>
    %43 = vector.shape_cast %42 : vector<1x1x256xf32> to vector<1x256xf32>
    %44 = vector.broadcast %43 : vector<1x256xf32> to vector<8x256xf32>
    %45 = arith.addf %41, %44 : vector<8x256xf32>
    %46 = vector.extract_strided_slice %45 {offsets = [0, 0], sizes = [8, 128], strides = [1, 1]} : vector<8x256xf32> to vector<8x128xf32>
    %47 = vector.extract_strided_slice %45 {offsets = [0, 128], sizes = [8, 128], strides = [1, 1]} : vector<8x256xf32> to vector<8x128xf32>
    %48 = arith.negf %47 : vector<8x128xf32>
    %49 = math.exp %48 : vector<8x128xf32>
    %cst_21 = arith.constant 1.000000e+00 : f32
    %50 = vector.broadcast %cst_21 : f32 to vector<8x128xf32>
    %51 = arith.addf %50, %49 : vector<8x128xf32>
    %52 = arith.divf %50, %51 : vector<8x128xf32>
    %53 = arith.mulf %1, %46 : vector<8x128xf32>
    %54 = arith.mulf %53, %52 : vector<8x128xf32>
    %55 = arith.addf %54, %37 : vector<8x128xf32>
    %56 = arith.truncf %55 : vector<8x128xf32> to vector<8x128xbf16>
    %c0_22 = arith.constant 0 : index
    %c0_23 = arith.constant 0 : index
    %57 = vector.load %arg4[%c0_22, %c0_23] : memref<8x128xbf16, #tpu.memory_space<vmem>>, vector<8x128xbf16>
    tpu.vector_store %arg4[%c0_22, %c0_23], %56 {strides = array<i32>} : memref<8x128xbf16, #tpu.memory_space<vmem>>, vector<8x128xbf16>,
    return
  }
  func.func @transform_0(%arg0: i32) -> (i32, i32) {
    %c0_i32 = arith.constant 0 : i32
    %c0_i32_0 = arith.constant 0 : i32
    return %arg0, %c0_i32 : i32, i32
  }
  func.func @transform_1(%arg0: i32) -> (i32, i32, i32) {
    %c0_i32 = arith.constant 0 : i32
    %c0_i32_0 = arith.constant 0 : i32
    %c0_i32_1 = arith.constant 0 : i32
    %c0_i32_2 = arith.constant 0 : i32
    return %c0_i32, %c0_i32_0, %c0_i32_1 : i32, i32, i32
  }
  func.func @transform_2(%arg0: i32) -> (i32, i32, i32) {
    %c0_i32 = arith.constant 0 : i32
    %c0_i32_0 = arith.constant 0 : i32
    %c0_i32_1 = arith.constant 0 : i32
    %c0_i32_2 = arith.constant 0 : i32
    return %c0_i32, %c0_i32_0, %c0_i32_1 : i32, i32, i32
  }
  func.func @transform_3(%arg0: i32) -> (i32, i32) {
    %c0_i32 = arith.constant 0 : i32
    %c0_i32_0 = arith.constant 0 : i32
    return %arg0, %c0_i32 : i32, i32
  }
}

</mosaic_0001>

<llo_original>
// kernel: tpu_custom_call.1
$region0: #{tpu_custom_call.1}
  #allocation0 [shape = 'u32[]', space=smem, size = 0x4, offset = 0x4, fixed_abs, tag = 'smem constant byte address 0x4 - core index']
  #allocation1 [shape = 'u32[144,128]{1,0:T(1,128)}', space=vmem, size = 0x12000, scoped, tag = 'internal scratch']
  %s0 = inlined_call_operand.hbm [shape: bf16[8,128], index: 0, kind: input, shape index: {}]
  %s1 = inlined_call_operand.hbm [shape: bf16[3,128,256], index: 1, kind: input, shape index: {}]
  %s2 = inlined_call_operand.vmem [shape: f32[3,1,256], index: 2, kind: input, shape index: {}]
  %s3 = inlined_call_operand.hbm [shape: bf16[8,128], index: 3, kind: output, shape index: {}]
  %s4 = sld [smem:[#allocation0]]
  $region30: #{tpu_custom_call.1} parent=0
    _
  %s6 = ssub.s32 1, %s4
  %s7 = scalar_select 0, %s6, %s4
  $region1: #{tpu_custom_call.1} parent=0
    #allocation2 [shape = 'u8[2048]{0}', space=vmem, size = 0x800, scoped, tag = 'input window, operand 0, single buffered']
    #allocation3 [shape = 's32[1]{0}', space=sflag, size = 0x4, scoped, tag = 'scoped memory for tpu_custom_call.1']
    #allocation4 [shape = 's32[1]{0}', space=sflag, size = 0x4, scoped, tag = 'scoped memory for tpu_custom_call.1']
    #allocation5 [shape = 'u8[196608]{0}', space=vmem, size = 0x30000, scoped, tag = 'input window, operand 1, single buffered']
    #allocation6 [shape = 's32[1]{0}', space=sflag, size = 0x4, scoped, tag = 'scoped memory for tpu_custom_call.1']
    #allocation7 [shape = 'u8[2048]{0}', space=vmem, size = 0x800, scoped, tag = 'output window, operand 0, single buffered']
    %8 = vsyncpa [#allocation3], 0
    %9 = vsyncpa [#allocation6], 0
    %10 = vsyncpa [#allocation4], 0
    // Predicated region
    $region2: #{tpu_custom_call.1} parent=1 // pred_check
      _
    $region3: #{tpu_custom_call.1} parent=1 // pred_check_branch
      %12 = sbr.rel (0) target = $region5
    $region4: #{tpu_custom_call.1} parent=1 // pred_region
      %s14 = ssub.s32 64, 64
      %15 = vsyncadd [#allocation3], %s14
      %s17 = sshll.u32 [#allocation2], 4
      %s18 = int_to_ptr.vmem [resolvable:$true] %s17
      %20 = dma.hbm_to_vmem [thread:$0]  %s0, 64, %s18, [#allocation3]
    $region5: #{tpu_custom_call.1} parent=1 // pred_fallthru
      _
    // Predicated region
    $region6: #{tpu_custom_call.1} parent=1 // pred_check
      _
    $region7: #{tpu_custom_call.1} parent=1 // pred_check_branch
      %22 = sbr.rel (0) target = $region9
    $region8: #{tpu_custom_call.1} parent=1 // pred_region
      %s24 = ssub.s32 6144, 6144
      %25 = vsyncadd [#allocation6], %s24
      %s26 = sshll.u32 [#allocation5], 4
      %s27 = int_to_ptr.vmem [resolvable:$true] %s26
      %32 = dma.hbm_to_vmem [thread:$0]  %s1, 6144, %s27, [#allocation6], 128, 128, 8
    $region9: #{tpu_custom_call.1} parent=1 // pred_fallthru
      _
    // Predicated region
    $region10: #{tpu_custom_call.1} parent=1 // pred_check
      _
    $region11: #{tpu_custom_call.1} parent=1 // pred_check_branch
      %34 = sbr.rel (0) target = $region13
    $region12: #{tpu_custom_call.1} parent=1 // pred_region
      _
    $region13: #{tpu_custom_call.1} parent=1 // pred_fallthru
      _
    // Predicated region
    $region14: #{tpu_custom_call.1} parent=1 // pred_check
      _
    $region15: #{tpu_custom_call.1} parent=1 // pred_check_branch
      %36 = sbr.rel (0) target = $region17
    $region16: #{tpu_custom_call.1} parent=1 // pred_region
      %37 = dma.done [#allocation3], 64
    $region17: #{tpu_custom_call.1} parent=1 // pred_fallthru
      _
    // Predicated region
    $region18: #{tpu_custom_call.1} parent=1 // pred_check
      _
    $region19: #{tpu_custom_call.1} parent=1 // pred_check_branch
      %39 = sbr.rel (0) target = $region21
    $region20: #{tpu_custom_call.1} parent=1 // pred_region
      %40 = dma.done [#allocation6], 6144
    $region21: #{tpu_custom_call.1} parent=1 // pred_fallthru
      _
    %v42 = vld [vmem:[#allocation2] sm:$0xf]
    %v43 = vunpack.c.l.bf16 %v42
    %v44 = vld [vmem:[#allocation5] sm:$0xff]
    %v45 = vld [vmem:[#allocation5 + $0x8] sm:$0xff]
    %v46 = vld [vmem:[#allocation5 + $0x10] sm:$0xff]
    %v47 = vld [vmem:[#allocation5 + $0x18] sm:$0xff]
    %v48 = vld [vmem:[#allocation5 + $0x20] sm:$0xff]
    %v49 = vld [vmem:[#allocation5 + $0x28] sm:$0xff]
    %v50 = vld [vmem:[#allocation5 + $0x30] sm:$0xff]
    %v51 = vld [vmem:[#allocation5 + $0x38] sm:$0xff]
    %v52 = vld [vmem:[#allocation5 + $0x40] sm:$0xff]
    %v53 = vld [vmem:[#allocation5 + $0x48] sm:$0xff]
    %v54 = vld [vmem:[#allocation5 + $0x50] sm:$0xff]
    %v55 = vld [vmem:[#allocation5 + $0x58] sm:$0xff]
    %v56 = vld [vmem:[#allocation5 + $0x60] sm:$0xff]
    %v57 = vld [vmem:[#allocation5 + $0x68] sm:$0xff]
    %v58 = vld [vmem:[#allocation5 + $0x70] sm:$0xff]
    %v59 = vld [vmem:[#allocation5 + $0x78] sm:$0xff]
    %v60 = vld [vmem:[%s2] sm:$0x3]
    %v62 = vlaneseq
    %v63 = vshrl.u32 %v62, 7
    %v64 = vsub.s32 0, %v63
    %v65 = vrot.slane %v60, %v64
    %v66 = vlaneseq
    %v67 = vshrl.u32 %v66, 7
    %v68 = vsub.s32 1, %v67
    %v69 = vrot.slane %v60, %v68
    %v88 = vunpack.c.l.b16 %v44
    %v89 = vunpack.c.h.b16 %v44
    %v90 = vunpack.c.l.b16 %v45
    %v91 = vunpack.c.h.b16 %v45
    %v92 = vunpack.c.l.b16 %v46
    %v93 = vunpack.c.h.b16 %v46
    %v94 = vunpack.c.l.b16 %v47
    %v95 = vunpack.c.h.b16 %v47
    %v96 = vunpack.c.l.b16 %v48
    %v97 = vunpack.c.h.b16 %v48
    %v98 = vunpack.c.l.b16 %v49
    %v99 = vunpack.c.h.b16 %v49
    %v100 = vunpack.c.l.b16 %v50
    %v101 = vunpack.c.h.b16 %v50
    %v102 = vunpack.c.l.b16 %v51
    %v103 = vunpack.c.h.b16 %v51
    %v104 = vunpack.c.l.b16 %v52
    %v105 = vunpack.c.h.b16 %v52
    %v106 = vunpack.c.l.b16 %v53
    %v107 = vunpack.c.h.b16 %v53
    %v108 = vunpack.c.l.b16 %v54
    %v109 = vunpack.c.h.b16 %v54
    %v110 = vunpack.c.l.b16 %v55
    %v111 = vunpack.c.h.b16 %v55
    %v112 = vunpack.c.l.b16 %v56
    %v113 = vunpack.c.h.b16 %v56
    %v114 = vunpack.c.l.b16 %v57
    %v115 = vunpack.c.h.b16 %v57
    %v116 = vunpack.c.l.b16 %v58
    %v117 = vunpack.c.h.b16 %v58
    %v118 = vunpack.c.l.b16 %v59
    %v119 = vunpack.c.h.b16 %v59
    %v120 = vpack.c.b16 %v90, %v88
    %v121 = vpack.c.b16 %v91, %v89
    %v122 = vpack.c.b16 %v94, %v92
    %v123 = vpack.c.b16 %v95, %v93
    %v124 = vpack.c.b16 %v98, %v96
    %v125 = vpack.c.b16 %v99, %v97
    %v126 = vpack.c.b16 %v102, %v100
    %v127 = vpack.c.b16 %v103, %v101
    %v128 = vpack.c.b16 %v106, %v104
    %v129 = vpack.c.b16 %v107, %v105
    %v130 = vpack.c.b16 %v110, %v108
    %v131 = vpack.c.b16 %v111, %v109
    %v132 = vpack.c.b16 %v114, %v112
    %v133 = vpack.c.b16 %v115, %v113
    %v134 = vpack.c.b16 %v118, %v116
    %v135 = vpack.c.b16 %v119, %v117
    %152 = vmatprep.subr.bf16.mxu0 %v121
    %153 = vmatpush1.bf16.msra.mxu0 %v120
    %154 = vmatprep.subr.bf16.mxu0 %v123
    %155 = vmatpush1.bf16.msra.mxu0 %v122
    %156 = vmatprep.subr.bf16.mxu0 %v125
    %157 = vmatpush1.bf16.msra.mxu0 %v124
    %158 = vmatprep.subr.bf16.mxu0 %v127
    %159 = vmatpush1.bf16.msra.mxu0 %v126
    %160 = vmatprep.subr.bf16.mxu0 %v129
    %161 = vmatpush1.bf16.msra.mxu0 %v128
    %162 = vmatprep.subr.bf16.mxu0 %v131
    %163 = vmatpush1.bf16.msra.mxu0 %v130
    %164 = vmatprep.subr.bf16.mxu0 %v133
    %165 = vmatpush1.bf16.msra.mxu0 %v132
    %166 = vmatprep.subr.bf16.mxu0 %v135
    %167 = vmatpush1.bf16.msra.mxu0 %v134
    %168 = vmatprep.subr.bf16.mxu0 0
    %169 = vmatpush1.bf16.msra.mxu0 0
    %170 = vmatprep.subr.bf16.mxu0 0
    %171 = vmatpush1.bf16.msra.mxu0 0
    %172 = vmatprep.subr.bf16.mxu0 0
    %173 = vmatpush1.bf16.msra.mxu0 0
    %174 = vmatprep.subr.bf16.mxu0 0
    %175 = vmatpush1.bf16.msra.mxu0 0
    %176 = vmatprep.subr.bf16.mxu0 0
    %177 = vmatpush1.bf16.msra.mxu0 0
    %178 = vmatprep.subr.bf16.mxu0 0
    %179 = vmatpush1.bf16.msra.mxu0 0
    %180 = vmatprep.subr.bf16.mxu0 0
    %181 = vmatpush1.bf16.msra.mxu0 0
    %182 = vmatprep.subr.bf16.mxu0 0
    %183 = vmatpush1.bf16.msra.mxu0 0
    %184 = vmatprep.mubr.bf16.mxu0 0
    %185 = vmatmul.mubr.bf16.gmra.mrb[0].mxu0 %v42
    %v186 = vpop.f32.mrb[0].mxu0
    %v187 = vadd.f32 %v65, %v186
    %v188 = vpop.f32.mrb[0].mxu0
    %v189 = vadd.f32 %v69, %v188
    %v190 = vpop.f32.mrb[0].mxu0
    %v191 = vpop.f32.mrb[0].mxu0
    %192 = vdwg.mxu0
    %v193 = vxor.u32 %v189, 2147483648
    %v194 = vmul.f32 %v193, 1.442695
    %v195 = vpow.pop %v194
    %v196 = vadd.f32 %v195, 1.0
    %v197 = vrcp.pop %v196
    %v198 = vmul.f32 1.0, %v197
    %v199 = vmul.f32 %v43, %v187
    %v200 = vmul.f32 %v199, %v198
    %v201 = vadd.f32 %v200, %v43
    %v202 = vpack.c.bf16 %v201, %v201
    %s203 = scalar_lea.vmem [#allocation5], 128
    %v204 = vld [vmem:[%s203] sm:$0xff]
    %v205 = vld [vmem:[%s203 + $0x8] sm:$0xff]
    %v206 = vld [vmem:[%s203 + $0x10] sm:$0xff]
    %v207 = vld [vmem:[%s203 + $0x18] sm:$0xff]
    %v208 = vld [vmem:[%s203 + $0x20] sm:$0xff]
    %v209 = vld [vmem:[%s203 + $0x28] sm:$0xff]
    %v210 = vld [vmem:[%s203 + $0x30] sm:$0xff]
    %v211 = vld [vmem:[%s203 + $0x38] sm:$0xff]
    %v212 = vld [vmem:[%s203 + $0x40] sm:$0xff]
    %v213 = vld [vmem:[%s203 + $0x48] sm:$0xff]
    %v214 = vld [vmem:[%s203 + $0x50] sm:$0xff]
    %v215 = vld [vmem:[%s203 + $0x58] sm:$0xff]
    %v216 = vld [vmem:[%s203 + $0x60] sm:$0xff]
    %v217 = vld [vmem:[%s203 + $0x68] sm:$0xff]
    %v218 = vld [vmem:[%s203 + $0x70] sm:$0xff]
    %v219 = vld [vmem:[%s203 + $0x78] sm:$0xff]
    %s220 = scalar_lea.vmem %s2, 2
    %v221 = vld [vmem:[%s220] sm:$0x3]
    %v223 = vlaneseq
    %v224 = vshrl.u32 %v223, 7
    %v225 = vsub.s32 0, %v224
    %v226 = vrot.slane %v221, %v225
    %v227 = vlaneseq
    %v228 = vshrl.u32 %v227, 7
    %v229 = vsub.s32 1, %v228
    %v230 = vrot.slane %v221, %v229
    %v249 = vunpack.c.l.b16 %v204
    %v250 = vunpack.c.h.b16 %v204
    %v251 = vunpack.c.l.b16 %v205
    %v252 = vunpack.c.h.b16 %v205
    %v253 = vunpack.c.l.b16 %v206
    %v254 = vunpack.c.h.b16 %v206
    %v255 = vunpack.c.l.b16 %v207
    %v256 = vunpack.c.h.b16 %v207
    %v257 = vunpack.c.l.b16 %v208
    %v258 = vunpack.c.h.b16 %v208
    %v259 = vunpack.c.l.b16 %v209
    %v260 = vunpack.c.h.b16 %v209
    %v261 = vunpack.c.l.b16 %v210
    %v262 = vunpack.c.h.b16 %v210
    %v263 = vunpack.c.l.b16 %v211
    %v264 = vunpack.c.h.b16 %v211
    %v265 = vunpack.c.l.b16 %v212
    %v266 = vunpack.c.h.b16 %v212
    %v267 = vunpack.c.l.b16 %v213
    %v268 = vunpack.c.h.b16 %v213
    %v269 = vunpack.c.l.b16 %v214
    %v270 = vunpack.c.h.b16 %v214
    %v271 = vunpack.c.l.b16 %v215
    %v272 = vunpack.c.h.b16 %v215
    %v273 = vunpack.c.l.b16 %v216
    %v274 = vunpack.c.h.b16 %v216
    %v275 = vunpack.c.l.b16 %v217
    %v276 = vunpack.c.h.b16 %v217
    %v277 = vunpack.c.l.b16 %v218
    %v278 = vunpack.c.h.b16 %v218
    %v279 = vunpack.c.l.b16 %v219
    %v280 = vunpack.c.h.b16 %v219
    %v281 = vpack.c.b16 %v251, %v249
    %v282 = vpack.c.b16 %v252, %v250
    %v283 = vpack.c.b16 %v255, %v253
    %v284 = vpack.c.b16 %v256, %v254
    %v285 = vpack.c.b16 %v259, %v257
    %v286 = vpack.c.b16 %v260, %v258
    %v287 = vpack.c.b16 %v263, %v261
    %v288 = vpack.c.b16 %v264, %v262
    %v289 = vpack.c.b16 %v267, %v265
    %v290 = vpack.c.b16 %v268, %v266
    %v291 = vpack.c.b16 %v271, %v269
    %v292 = vpack.c.b16 %v272, %v270
    %v293 = vpack.c.b16 %v275, %v273
    %v294 = vpack.c.b16 %v276, %v274
    %v295 = vpack.c.b16 %v279, %v277
    %v296 = vpack.c.b16 %v280, %v278
    %313 = vmatprep.subr.bf16.mxu0 %v282
    %314 = vmatpush1.bf16.msra.mxu0 %v281
    %315 = vmatprep.subr.bf16.mxu0 %v284
    %316 = vmatpush1.bf16.msra.mxu0 %v283
    %317 = vmatprep.subr.bf16.mxu0 %v286
    %318 = vmatpush1.bf16.msra.mxu0 %v285
    %319 = vmatprep.subr.bf16.mxu0 %v288
    %320 = vmatpush1.bf16.msra.mxu0 %v287
    %321 = vmatprep.subr.bf16.mxu0 %v290
    %322 = vmatpush1.bf16.msra.mxu0 %v289
    %323 = vmatprep.subr.bf16.mxu0 %v292
    %324 = vmatpush1.bf16.msra.mxu0 %v291
    %325 = vmatprep.subr.bf16.mxu0 %v294
    %326 = vmatpush1.bf16.msra.mxu0 %v293
    %327 = vmatprep.subr.bf16.mxu0 %v296
    %328 = vmatpush1.bf16.msra.mxu0 %v295
    %329 = vmatprep.subr.bf16.mxu0 0
    %330 = vmatpush1.bf16.msra.mxu0 0
    %331 = vmatprep.subr.bf16.mxu0 0
    %332 = vmatpush1.bf16.msra.mxu0 0
    %333 = vmatprep.subr.bf16.mxu0 0
    %334 = vmatpush1.bf16.msra.mxu0 0
    %335 = vmatprep.subr.bf16.mxu0 0
    %336 = vmatpush1.bf16.msra.mxu0 0
    %337 = vmatprep.subr.bf16.mxu0 0
    %338 = vmatpush1.bf16.msra.mxu0 0
    %339 = vmatprep.subr.bf16.mxu0 0
    %340 = vmatpush1.bf16.msra.mxu0 0
    %341 = vmatprep.subr.bf16.mxu0 0
    %342 = vmatpush1.bf16.msra.mxu0 0
    %343 = vmatprep.subr.bf16.mxu0 0
    %344 = vmatpush1.bf16.msra.mxu0 0
    %345 = vmatprep.mubr.bf16.mxu0 0
    %346 = vmatmul.mubr.bf16.gmra.mrb[0].mxu0 %v202
    %v347 = vpop.f32.mrb[0].mxu0
    %v348 = vadd.f32 %v226, %v347
    %v349 = vpop.f32.mrb[0].mxu0
    %v350 = vadd.f32 %v230, %v349
    %v351 = vpop.f32.mrb[0].mxu0
    %v352 = vpop.f32.mrb[0].mxu0
    %353 = vdwg.mxu0
    %v354 = vxor.u32 %v350, 2147483648
    %v355 = vmul.f32 %v354, 1.442695
    %v356 = vpow.pop %v355
    %v357 = vadd.f32 %v356, 1.0
    %v358 = vrcp.pop %v357
    %v359 = vmul.f32 1.0, %v358
    %v360 = vmul.f32 %v43, %v348
    %v361 = vmul.f32 %v360, %v359
    %v362 = vadd.f32 %v361, %v201
    %v363 = vpack.c.bf16 %v362, %v362
    %s364 = scalar_lea.vmem [#allocation5], 256
    %v365 = vld [vmem:[%s364] sm:$0xff]
    %v366 = vld [vmem:[%s364 + $0x8] sm:$0xff]
    %v367 = vld [vmem:[%s364 + $0x10] sm:$0xff]
    %v368 = vld [vmem:[%s364 + $0x18] sm:$0xff]
    %v369 = vld [vmem:[%s364 + $0x20] sm:$0xff]
    %v370 = vld [vmem:[%s364 + $0x28] sm:$0xff]
    %v371 = vld [vmem:[%s364 + $0x30] sm:$0xff]
    %v372 = vld [vmem:[%s364 + $0x38] sm:$0xff]
    %v373 = vld [vmem:[%s364 + $0x40] sm:$0xff]
    %v374 = vld [vmem:[%s364 + $0x48] sm:$0xff]
    %v375 = vld [vmem:[%s364 + $0x50] sm:$0xff]
    %v376 = vld [vmem:[%s364 + $0x58] sm:$0xff]
    %v377 = vld [vmem:[%s364 + $0x60] sm:$0xff]
    %v378 = vld [vmem:[%s364 + $0x68] sm:$0xff]
    %v379 = vld [vmem:[%s364 + $0x70] sm:$0xff]
    %v380 = vld [vmem:[%s364 + $0x78] sm:$0xff]
    %s381 = scalar_lea.vmem %s2, 4
    %v382 = vld [vmem:[%s381] sm:$0x3]
    %v384 = vlaneseq
    %v385 = vshrl.u32 %v384, 7
    %v386 = vsub.s32 0, %v385
    %v387 = vrot.slane %v382, %v386
    %v388 = vlaneseq
    %v389 = vshrl.u32 %v388, 7
    %v390 = vsub.s32 1, %v389
    %v391 = vrot.slane %v382, %v390
    %v410 = vunpack.c.l.b16 %v365
    %v411 = vunpack.c.h.b16 %v365
    %v412 = vunpack.c.l.b16 %v366
    %v413 = vunpack.c.h.b16 %v366
    %v414 = vunpack.c.l.b16 %v367
    %v415 = vunpack.c.h.b16 %v367
    %v416 = vunpack.c.l.b16 %v368
    %v417 = vunpack.c.h.b16 %v368
    %v418 = vunpack.c.l.b16 %v369
    %v419 = vunpack.c.h.b16 %v369
    %v420 = vunpack.c.l.b16 %v370
    %v421 = vunpack.c.h.b16 %v370
    %v422 = vunpack.c.l.b16 %v371
    %v423 = vunpack.c.h.b16 %v371
    %v424 = vunpack.c.l.b16 %v372
    %v425 = vunpack.c.h.b16 %v372
    %v426 = vunpack.c.l.b16 %v373
    %v427 = vunpack.c.h.b16 %v373
    %v428 = vunpack.c.l.b16 %v374
    %v429 = vunpack.c.h.b16 %v374
    %v430 = vunpack.c.l.b16 %v375
    %v431 = vunpack.c.h.b16 %v375
    %v432 = vunpack.c.l.b16 %v376
    %v433 = vunpack.c.h.b16 %v376
    %v434 = vunpack.c.l.b16 %v377
    %v435 = vunpack.c.h.b16 %v377
    %v436 = vunpack.c.l.b16 %v378
    %v437 = vunpack.c.h.b16 %v378
    %v438 = vunpack.c.l.b16 %v379
    %v439 = vunpack.c.h.b16 %v379
    %v440 = vunpack.c.l.b16 %v380
    %v441 = vunpack.c.h.b16 %v380
    %v442 = vpack.c.b16 %v412, %v410
    %v443 = vpack.c.b16 %v413, %v411
    %v444 = vpack.c.b16 %v416, %v414
    %v445 = vpack.c.b16 %v417, %v415
    %v446 = vpack.c.b16 %v420, %v418
    %v447 = vpack.c.b16 %v421, %v419
    %v448 = vpack.c.b16 %v424, %v422
    %v449 = vpack.c.b16 %v425, %v423
    %v450 = vpack.c.b16 %v428, %v426
    %v451 = vpack.c.b16 %v429, %v427
    %v452 = vpack.c.b16 %v432, %v430
    %v453 = vpack.c.b16 %v433, %v431
    %v454 = vpack.c.b16 %v436, %v434
    %v455 = vpack.c.b16 %v437, %v435
    %v456 = vpack.c.b16 %v440, %v438
    %v457 = vpack.c.b16 %v441, %v439
    %474 = vmatprep.subr.bf16.mxu0 %v443
    %475 = vmatpush1.bf16.msra.mxu0 %v442
    %476 = vmatprep.subr.bf16.mxu0 %v445
    %477 = vmatpush1.bf16.msra.mxu0 %v444
    %478 = vmatprep.subr.bf16.mxu0 %v447
    %479 = vmatpush1.bf16.msra.mxu0 %v446
    %480 = vmatprep.subr.bf16.mxu0 %v449
    %481 = vmatpush1.bf16.msra.mxu0 %v448
    %482 = vmatprep.subr.bf16.mxu0 %v451
    %483 = vmatpush1.bf16.msra.mxu0 %v450
    %484 = vmatprep.subr.bf16.mxu0 %v453
    %485 = vmatpush1.bf16.msra.mxu0 %v452
    %486 = vmatprep.subr.bf16.mxu0 %v455
    %487 = vmatpush1.bf16.msra.mxu0 %v454
    %488 = vmatprep.subr.bf16.mxu0 %v457
    %489 = vmatpush1.bf16.msra.mxu0 %v456
    %490 = vmatprep.subr.bf16.mxu0 0
    %491 = vmatpush1.bf16.msra.mxu0 0
    %492 = vmatprep.subr.bf16.mxu0 0
    %493 = vmatpush1.bf16.msra.mxu0 0
    %494 = vmatprep.subr.bf16.mxu0 0
    %495 = vmatpush1.bf16.msra.mxu0 0
    %496 = vmatprep.subr.bf16.mxu0 0
    %497 = vmatpush1.bf16.msra.mxu0 0
    %498 = vmatprep.subr.bf16.mxu0 0
    %499 = vmatpush1.bf16.msra.mxu0 0
    %500 = vmatprep.subr.bf16.mxu0 0
    %501 = vmatpush1.bf16.msra.mxu0 0
    %502 = vmatprep.subr.bf16.mxu0 0
    %503 = vmatpush1.bf16.msra.mxu0 0
    %504 = vmatprep.subr.bf16.mxu0 0
    %505 = vmatpush1.bf16.msra.mxu0 0
    %506 = vmatprep.mubr.bf16.mxu0 0
    %507 = vmatmul.mubr.bf16.gmra.mrb[0].mxu0 %v363
    %v508 = vpop.f32.mrb[0].mxu0
    %v509 = vadd.f32 %v387, %v508
    %v510 = vpop.f32.mrb[0].mxu0
    %v511 = vadd.f32 %v391, %v510
    %v512 = vpop.f32.mrb[0].mxu0
    %v513 = vpop.f32.mrb[0].mxu0
    %514 = vdwg.mxu0
    %v515 = vxor.u32 %v511, 2147483648
    %v516 = vmul.f32 %v515, 1.442695
    %v517 = vpow.pop %v516
    %v518 = vadd.f32 %v517, 1.0
    %v519 = vrcp.pop %v518
    %v520 = vmul.f32 1.0, %v519
    %v521 = vmul.f32 %v43, %v509
    %v522 = vmul.f32 %v521, %v520
    %v523 = vadd.f32 %v522, %v362
    %v524 = vpack.c.bf16 %v523, %v523
    %525 = vst [vmem:[#allocation7] sm:$0xf] %v524
    // Predicated region
    $region22: #{tpu_custom_call.1} parent=1 // pred_check
      _
    $region23: #{tpu_custom_call.1} parent=1 // pred_check_branch
      %527 = sbr.rel (0) target = $region25
    $region24: #{tpu_custom_call.1} parent=1 // pred_region
      %s529 = ssub.s32 64, 64
      %530 = vsyncadd [#allocation4], %s529
      %s532 = sshll.u32 [#allocation7], 4
      %s533 = int_to_ptr.vmem [resolvable:$true] %s532
      %535 = dma.vmem_to_hbm [thread:$0]  %s533, 64, %s3, [#allocation4]
    $region25: #{tpu_custom_call.1} parent=1 // pred_fallthru
      _
    // Predicated region
    $region26: #{tpu_custom_call.1} parent=1 // pred_check
      _
    $region27: #{tpu_custom_call.1} parent=1 // pred_check_branch
      %537 = sbr.rel (0) target = $region29
    $region28: #{tpu_custom_call.1} parent=1 // pred_region
      %538 = dma.done [#allocation4], 64
    $region29: #{tpu_custom_call.1} parent=1 // pred_fallthru
      _
    %539 = vsyncpa [#allocation3], 1
    %540 = vsyncpa [#allocation6], 1
    %541 = vsyncpa [#allocation4], 1

</llo_original>
